<compile_context>
chip_gen: v7x
topology: tpu7x:2x2x1
jax: 0.10.0
libtpu: 0.0.40
codegen_flags: <defaults>
</compile_context>

<pallas_src>
import numpy as np
import jax
import jax.numpy as jnp
from jax.experimental import pallas as pl
from jax.experimental.pallas import tpu as pltpu

_NUM_TRIALS = 5   # reference loop: `while trial_count < 5`
_LANE = 128       # lane-dense width for the counts output


def _make_counts_kernel(thres_list, sm1, lane):
    """Single-invocation kernel: base mask + per-frame inlier counts for every
    candidate triangulation-angle threshold (compile-time constants)."""
    thres_f = tuple(float(t) for t in thres_list)

    def kernel(vis_ref, fmat_ref, cheir_ref, tri_ref, counts_ref, base_ref):
        # threshold-independent base inlier mask, computed exactly once
        base = jnp.logical_and(
            vis_ref[...] > 0.05,
            jnp.logical_and(fmat_ref[...] != 0, cheir_ref[...] != 0))
        base_ref[...] = base.astype(jnp.int8)

        tri = tri_ref[...]
        # fully unrolled over the (at most 5) candidate thresholds
        for t, th in enumerate(thres_f):
            m = jnp.logical_and(base, tri >= th)
            cnt = jnp.sum(m.astype(jnp.float32), axis=-1, keepdims=True)  # (S-1, 1)
            # lane-dense store (broadcast count across 128 lanes)
            counts_ref[t] = jnp.broadcast_to(cnt, (sm1, lane))

    return kernel


def _mask_kernel(thres_ref, base_ref, tri_ref, mask_ref):
    """Tiny follow-up kernel: materialize only the selected inlier mask."""
    thres = thres_ref[0].astype(jnp.float32)
    mask_ref[...] = jnp.logical_and(
        base_ref[...] != 0, tri_ref[...] >= thres).astype(jnp.int8)


def find_best_initial_pair_pallas(pred_vis, inlier_fmat, cheirality_mask_pair,
                                  triangle_value_pair, init_tri_angle_thres=16):
    """Pallas-backed equivalent of find_best_initial_pair (including the
    inlier_vis / inlier_geo_vis construction that feeds it).

    Returns (inlier_total: bool (S-1, N) device array, final_tri_angle_thres: int).
    """
    S, N = pred_vis.shape
    Sm1 = inlier_fmat.shape[0]
    assert Sm1 == S - 1

    # candidate thresholds the reference while-loop can try (at most 5 halvings)
    thres_list = []
    th = int(init_tri_angle_thres)
    for _ in range(_NUM_TRIALS):
        thres_list.append(th)
        th //= 2

    vis_f = pred_vis[1:].astype(jnp.float32)          # pre-slice frame 0 away
    fmat_i = inlier_fmat.astype(jnp.int8)
    cheir_i = cheirality_mask_pair.astype(jnp.int8)
    tri_f = triangle_value_pair.astype(jnp.float32)

    # ---- call 1: base mask + lane-dense per-frame counts for all thresholds
    counts, base = pl.pallas_call(
        _make_counts_kernel(thres_list, Sm1, _LANE),
        out_shape=(jax.ShapeDtypeStruct((_NUM_TRIALS, Sm1, _LANE), jnp.float32),
                   jax.ShapeDtypeStruct((Sm1, N), jnp.int8)),
    )(vis_f, fmat_i, cheir_i, tri_f)

    # device_get on the small counts array is the only host sync needed here
    counts_np = np.asarray(jax.device_get(counts))[:, :, 0]   # (T, S-1)

    # host replication of the data-dependent threshold-halving loop
    thres = int(init_tri_angle_thres)
    sel = 0
    trial_count = 0
    while trial_count < _NUM_TRIALS:
        sel = trial_count
        max_num_inlier = float(counts_np[trial_count].max())
        if max_num_inlier >= 100 and (max_num_inlier / N) >= 0.25:
            break
        if thres < 2:
            break
        thres //= 2
        trial_count += 1

    # ---- call 2: materialize only the selected mask (threshold via SMEM scalar)
    mask = pl.pallas_call(
        _mask_kernel,
        out_shape=jax.ShapeDtypeStruct((Sm1, N), jnp.int8),
        in_specs=[
            pl.BlockSpec(memory_space=pltpu.MemorySpace.SMEM),
            pl.BlockSpec(memory_space=pltpu.MemorySpace.VMEM),
            pl.BlockSpec(memory_space=pltpu.MemorySpace.VMEM),
        ],
        out_specs=pl.BlockSpec(memory_space=pltpu.MemorySpace.VMEM),
    )(jnp.asarray([thres_list[sel]], dtype=jnp.int32), base, tri_f)

    inlier_total = mask != 0   # bool (S-1, N), stays on device
    return inlier_total, thres


# ------------------------------------------------------------------ reference
def find_best_initial_pair_ref(pred_vis, inlier_fmat, cheir, tri, init_thres):
    """Pure-numpy reference mirroring the PyTorch code exactly."""
    inlier_vis = pred_vis > 0.05
    inlier_geo_vis = np.logical_and(inlier_fmat, inlier_vis[1:])
    N = inlier_geo_vis.shape[-1]
    trial_count = 0
    thres = init_thres
    inlier_total = None
    while trial_count < 5:
        triangle_mask = tri >= thres
        inlier_total = np.logical_and(inlier_geo_vis, cheir)
        inlier_total = np.logical_and(inlier_total, triangle_mask)
        inlier_num_per_frame = inlier_total.sum(axis=-1)
        max_num_inlier = inlier_num_per_frame.max()
        if max_num_inlier >= 100 and (max_num_inlier / N) >= 0.25:
            break
        if thres < 2:
            break
        thres = thres // 2
        trial_count += 1
    return inlier_total, thres


# TODO(synk): init_BA / global_BA / iterative_global_BA rely on pycolmap's
#             Ceres-based bundle adjustment -- host library call, no Pallas path.
# TODO(synk): triangulate_by_pair / triangulate_tracks (RANSAC DLT) and
#             refine_pose / get_EFP / cam_from_img are outside the listed
#             dependency scope and are not reimplemented here.

if __name__ == "__main__":
    key = jax.random.PRNGKey(0)
    S, N = 8, 512            # S frames, N tracks (N multiple of 128 for lanes)
    init_tri_angle_thres = 16

    k1, k2, k3, k4 = jax.random.split(key, 4)
    pred_vis = jax.random.uniform(k1, (S, N), dtype=jnp.float32)          # visibility scores
    inlier_fmat = jax.random.bernoulli(k2, 0.6, (S - 1, N))               # fmat inlier mask
    cheirality_mask_pair = jax.random.bernoulli(k3, 0.7, (S - 1, N))      # cheirality mask
    triangle_value_pair = jax.random.uniform(k4, (S - 1, N),
                                             dtype=jnp.float32) * 30.0    # tri angles

    inlier_total, final_thres = find_best_initial_pair_pallas(
        pred_vis, inlier_fmat, cheirality_mask_pair, triangle_value_pair,
        init_tri_angle_thres)
    inlier_total = jax.block_until_ready(inlier_total)

    ref_mask, ref_thres = find_best_initial_pair_ref(
        np.asarray(pred_vis), np.asarray(inlier_fmat),
        np.asarray(cheirality_mask_pair), np.asarray(triangle_value_pair),
        init_tri_angle_thres)

    assert final_thres == ref_thres, (final_thres, ref_thres)
    assert np.array_equal(np.asarray(inlier_total), ref_mask)
    print("KERNEL_OK")
</pallas_src>

<mosaic_0001>
module attributes {stable_mosaic.version = 11 : i64} {
  func.func @kernel(%arg0: memref<7x512xf32, #tpu.memory_space<vmem>>, %arg1: memref<7x512xi8, #tpu.memory_space<vmem>>, %arg2: memref<7x512xi8, #tpu.memory_space<vmem>>, %arg3: memref<7x512xf32, #tpu.memory_space<vmem>>, %arg4: memref<5x7x128xf32, #tpu.memory_space<vmem>>, %arg5: memref<7x512xi8, #tpu.memory_space<vmem>>) attributes {dimension_semantics = [], scalar_prefetch = 0 : i64, scratch_operands = 0 : i64, tpu.core_type = #tpu.core_type<tc>} {
    %c0 = arith.constant 0 : index
    %c0_0 = arith.constant 0 : index
    %0 = vector.load %arg0[%c0, %c0_0] : memref<7x512xf32, #tpu.memory_space<vmem>>, vector<7x512xf32>
    %cst = arith.constant 5.000000e-02 : f32
    %1 = vector.broadcast %cst : f32 to vector<7x512xf32>
    %2 = arith.cmpf ogt, %0, %1 : vector<7x512xf32>
    %c0_1 = arith.constant 0 : index
    %c0_2 = arith.constant 0 : index
    %3 = vector.load %arg1[%c0_1, %c0_2] : memref<7x512xi8, #tpu.memory_space<vmem>>, vector<7x512xi8>
    %c0_i8 = arith.constant 0 : i8
    %4 = vector.broadcast %c0_i8 : i8 to vector<7x512xi8>
    %5 = arith.cmpi ne, %3, %4 : vector<7x512xi8>
    %c0_3 = arith.constant 0 : index
    %c0_4 = arith.constant 0 : index
    %6 = vector.load %arg2[%c0_3, %c0_4] : memref<7x512xi8, #tpu.memory_space<vmem>>, vector<7x512xi8>
    %c0_i8_5 = arith.constant 0 : i8
    %7 = vector.broadcast %c0_i8_5 : i8 to vector<7x512xi8>
    %8 = arith.cmpi ne, %6, %7 : vector<7x512xi8>
    %9 = arith.andi %5, %8 : vector<7x512xi1>
    %10 = arith.andi %2, %9 : vector<7x512xi1>
    %11 = arith.extui %10 : vector<7x512xi1> to vector<7x512xi8>
    %c0_6 = arith.constant 0 : index
    %c0_7 = arith.constant 0 : index
    %12 = vector.load %arg5[%c0_6, %c0_7] : memref<7x512xi8, #tpu.memory_space<vmem>>, vector<7x512xi8>
    tpu.vector_store %arg5[%c0_6, %c0_7], %11 {strides = array<i32>} : memref<7x512xi8, #tpu.memory_space<vmem>>, vector<7x512xi8>,
    %c0_8 = arith.constant 0 : index
    %c0_9 = arith.constant 0 : index
    %13 = vector.load %arg3[%c0_8, %c0_9] : memref<7x512xf32, #tpu.memory_space<vmem>>, vector<7x512xf32>
    %cst_10 = arith.constant 1.600000e+01 : f32
    %14 = vector.broadcast %cst_10 : f32 to vector<7x512xf32>
    %15 = arith.cmpf oge, %13, %14 : vector<7x512xf32>
    %16 = arith.andi %10, %15 : vector<7x512xi1>
    %17 = arith.extui %16 : vector<7x512xi1> to vector<7x512xi32>
    %18 = arith.sitofp %17 : vector<7x512xi32> to vector<7x512xf32>
    %cst_11 = arith.constant dense<0.000000e+00> : vector<7xf32>
    %19 = vector.multi_reduction <add>, %18, %cst_11 [1] : vector<7x512xf32> to vector<7xf32>
    %20 = vector.shape_cast %19 : vector<7xf32> to vector<7x1xf32>
    %21 = vector.shape_cast %20 : vector<7x1xf32> to vector<7x1xf32>
    %22 = vector.broadcast %21 : vector<7x1xf32> to vector<7x128xf32>
    %c0_12 = arith.constant 0 : index
    %c0_13 = arith.constant 0 : index
    %c0_14 = arith.constant 0 : index
    %23 = vector.load %arg4[%c0_12, %c0_13, %c0_14] : memref<5x7x128xf32, #tpu.memory_space<vmem>>, vector<1x7x128xf32>
    %24 = vector.shape_cast %23 : vector<1x7x128xf32> to vector<7x128xf32>
    %25 = vector.shape_cast %22 : vector<7x128xf32> to vector<1x7x128xf32>
    tpu.vector_store %arg4[%c0_12, %c0_13, %c0_14], %25 {strides = array<i32>} : memref<5x7x128xf32, #tpu.memory_space<vmem>>, vector<1x7x128xf32>,
    %cst_15 = arith.constant 8.000000e+00 : f32
    %26 = vector.broadcast %cst_15 : f32 to vector<7x512xf32>
    %27 = arith.cmpf oge, %13, %26 : vector<7x512xf32>
    %28 = arith.andi %10, %27 : vector<7x512xi1>
    %29 = arith.extui %28 : vector<7x512xi1> to vector<7x512xi32>
    %30 = arith.sitofp %29 : vector<7x512xi32> to vector<7x512xf32>
    %cst_16 = arith.constant dense<0.000000e+00> : vector<7xf32>
    %31 = vector.multi_reduction <add>, %30, %cst_16 [1] : vector<7x512xf32> to vector<7xf32>
    %32 = vector.shape_cast %31 : vector<7xf32> to vector<7x1xf32>
    %33 = vector.shape_cast %32 : vector<7x1xf32> to vector<7x1xf32>
    %34 = vector.broadcast %33 : vector<7x1xf32> to vector<7x128xf32>
    %c1 = arith.constant 1 : index
    %c0_17 = arith.constant 0 : index
    %c0_18 = arith.constant 0 : index
    %35 = vector.load %arg4[%c1, %c0_17, %c0_18] : memref<5x7x128xf32, #tpu.memory_space<vmem>>, vector<1x7x128xf32>
    %36 = vector.shape_cast %35 : vector<1x7x128xf32> to vector<7x128xf32>
    %37 = vector.shape_cast %34 : vector<7x128xf32> to vector<1x7x128xf32>
    tpu.vector_store %arg4[%c1, %c0_17, %c0_18], %37 {strides = array<i32>} : memref<5x7x128xf32, #tpu.memory_space<vmem>>, vector<1x7x128xf32>,
    %cst_19 = arith.constant 4.000000e+00 : f32
    %38 = vector.broadcast %cst_19 : f32 to vector<7x512xf32>
    %39 = arith.cmpf oge, %13, %38 : vector<7x512xf32>
    %40 = arith.andi %10, %39 : vector<7x512xi1>
    %41 = arith.extui %40 : vector<7x512xi1> to vector<7x512xi32>
    %42 = arith.sitofp %41 : vector<7x512xi32> to vector<7x512xf32>
    %cst_20 = arith.constant dense<0.000000e+00> : vector<7xf32>
    %43 = vector.multi_reduction <add>, %42, %cst_20 [1] : vector<7x512xf32> to vector<7xf32>
    %44 = vector.shape_cast %43 : vector<7xf32> to vector<7x1xf32>
    %45 = vector.shape_cast %44 : vector<7x1xf32> to vector<7x1xf32>
    %46 = vector.broadcast %45 : vector<7x1xf32> to vector<7x128xf32>
    %c2 = arith.constant 2 : index
    %c0_21 = arith.constant 0 : index
    %c0_22 = arith.constant 0 : index
    %47 = vector.load %arg4[%c2, %c0_21, %c0_22] : memref<5x7x128xf32, #tpu.memory_space<vmem>>, vector<1x7x128xf32>
    %48 = vector.shape_cast %47 : vector<1x7x128xf32> to vector<7x128xf32>
    %49 = vector.shape_cast %46 : vector<7x128xf32> to vector<1x7x128xf32>
    tpu.vector_store %arg4[%c2, %c0_21, %c0_22], %49 {strides = array<i32>} : memref<5x7x128xf32, #tpu.memory_space<vmem>>, vector<1x7x128xf32>,
    %cst_23 = arith.constant 2.000000e+00 : f32
    %50 = vector.broadcast %cst_23 : f32 to vector<7x512xf32>
    %51 = arith.cmpf oge, %13, %50 : vector<7x512xf32>
    %52 = arith.andi %10, %51 : vector<7x512xi1>
    %53 = arith.extui %52 : vector<7x512xi1> to vector<7x512xi32>
    %54 = arith.sitofp %53 : vector<7x512xi32> to vector<7x512xf32>
    %cst_24 = arith.constant dense<0.000000e+00> : vector<7xf32>
    %55 = vector.multi_reduction <add>, %54, %cst_24 [1] : vector<7x512xf32> to vector<7xf32>
    %56 = vector.shape_cast %55 : vector<7xf32> to vector<7x1xf32>
    %57 = vector.shape_cast %56 : vector<7x1xf32> to vector<7x1xf32>
    %58 = vector.broadcast %57 : vector<7x1xf32> to vector<7x128xf32>
    %c3 = arith.constant 3 : index
    %c0_25 = arith.constant 0 : index
    %c0_26 = arith.constant 0 : index
    %59 = vector.load %arg4[%c3, %c0_25, %c0_26] : memref<5x7x128xf32, #tpu.memory_space<vmem>>, vector<1x7x128xf32>
    %60 = vector.shape_cast %59 : vector<1x7x128xf32> to vector<7x128xf32>
    %61 = vector.shape_cast %58 : vector<7x128xf32> to vector<1x7x128xf32>
    tpu.vector_store %arg4[%c3, %c0_25, %c0_26], %61 {strides = array<i32>} : memref<5x7x128xf32, #tpu.memory_space<vmem>>, vector<1x7x128xf32>,
    %cst_27 = arith.constant 1.000000e+00 : f32
    %62 = vector.broadcast %cst_27 : f32 to vector<7x512xf32>
    %63 = arith.cmpf oge, %13, %62 : vector<7x512xf32>
    %64 = arith.andi %10, %63 : vector<7x512xi1>
    %65 = arith.extui %64 : vector<7x512xi1> to vector<7x512xi32>
    %66 = arith.sitofp %65 : vector<7x512xi32> to vector<7x512xf32>
    %cst_28 = arith.constant dense<0.000000e+00> : vector<7xf32>
    %67 = vector.multi_reduction <add>, %66, %cst_28 [1] : vector<7x512xf32> to vector<7xf32>
    %68 = vector.shape_cast %67 : vector<7xf32> to vector<7x1xf32>
    %69 = vector.shape_cast %68 : vector<7x1xf32> to vector<7x1xf32>
    %70 = vector.broadcast %69 : vector<7x1xf32> to vector<7x128xf32>
    %c4 = arith.constant 4 : index
    %c0_29 = arith.constant 0 : index
    %c0_30 = arith.constant 0 : index
    %71 = vector.load %arg4[%c4, %c0_29, %c0_30] : memref<5x7x128xf32, #tpu.memory_space<vmem>>, vector<1x7x128xf32>
    %72 = vector.shape_cast %71 : vector<1x7x128xf32> to vector<7x128xf32>
    %73 = vector.shape_cast %70 : vector<7x128xf32> to vector<1x7x128xf32>
    tpu.vector_store %arg4[%c4, %c0_29, %c0_30], %73 {strides = array<i32>} : memref<5x7x128xf32, #tpu.memory_space<vmem>>, vector<1x7x128xf32>,
    return
  }
}

</mosaic_0001>

<llo_original>
// kernel: tpu_custom_call.1
$region0: #{tpu_custom_call.1}
  #allocation0 [shape = 'u32[]', space=smem, size = 0x4, offset = 0x4, fixed_abs, tag = 'smem constant byte address 0x4 - core index']
  #allocation1 [shape = 'u32[144,128]{1,0:T(1,128)}', space=vmem, size = 0x12000, scoped, tag = 'internal scratch']
  %s0 = inlined_call_operand.hbm [shape: f32[7,512], index: 0, kind: input, shape index: {}]
  %s1 = inlined_call_operand.hbm [shape: s8[7,512], index: 1, kind: input, shape index: {}]
  %s2 = inlined_call_operand.hbm [shape: s8[7,512], index: 2, kind: input, shape index: {}]
  %s3 = inlined_call_operand.hbm [shape: f32[7,512], index: 3, kind: input, shape index: {}]
  %s4 = inlined_call_operand.hbm [shape: f32[5,7,128], index: 4, kind: output, shape index: {0}]
  %s5 = inlined_call_operand.hbm [shape: s8[7,512], index: 5, kind: output, shape index: {1}]
  %6 = xla_tuple %s4, %s5
  %s7 = sld [smem:[#allocation0]]
  $region50: #{tpu_custom_call.1} parent=0
    _
  %s9 = ssub.s32 1, %s7
  %s10 = scalar_select 0, %s9, %s7
  $region1: #{tpu_custom_call.1} parent=0
    #allocation2 [shape = 'u8[16384]{0}', space=vmem, size = 0x4000, scoped, tag = 'input window, operand 0, single buffered']
    #allocation3 [shape = 's32[1]{0}', space=sflag, size = 0x4, scoped, tag = 'scoped memory for tpu_custom_call.1']
    #allocation4 [shape = 's32[1]{0}', space=sflag, size = 0x4, scoped, tag = 'scoped memory for tpu_custom_call.1']
    #allocation5 [shape = 'u8[4096]{0}', space=vmem, size = 0x1000, scoped, tag = 'input window, operand 1, single buffered']
    #allocation6 [shape = 's32[1]{0}', space=sflag, size = 0x4, scoped, tag = 'scoped memory for tpu_custom_call.1']
    #allocation7 [shape = 'u8[4096]{0}', space=vmem, size = 0x1000, scoped, tag = 'input window, operand 2, single buffered']
    #allocation8 [shape = 'u8[16384]{0}', space=vmem, size = 0x4000, scoped, tag = 'input window, operand 3, single buffered']
    #allocation9 [shape = 's32[1]{0}', space=sflag, size = 0x4, scoped, tag = 'scoped memory for tpu_custom_call.1']
    #allocation10 [shape = 'u8[20480]{0}', space=vmem, size = 0x5000, scoped, tag = 'output window, operand 0, single buffered']
    #allocation11 [shape = 'u8[4096]{0}', space=vmem, size = 0x1000, scoped, tag = 'output window, operand 1, single buffered']
    #allocation12 [shape = 's32[1]{0}', space=sflag, size = 0x4, scoped, tag = 'scoped memory for tpu_custom_call.1']
    %11 = vsyncpa [#allocation3], 0
    %12 = vsyncpa [#allocation6], 0
    %13 = vsyncpa [#allocation9], 0
    %14 = vsyncpa [#allocation4], 0
    %15 = vsyncpa [#allocation12], 0
    // Predicated region
    $region2: #{tpu_custom_call.1} parent=1 // pred_check
      _
    $region3: #{tpu_custom_call.1} parent=1 // pred_check_branch
      %17 = sbr.rel (0) target = $region5
    $region4: #{tpu_custom_call.1} parent=1 // pred_region
      %s19 = ssub.s32 512, 512
      %20 = vsyncadd [#allocation3], %s19
      %s22 = sshll.u32 [#allocation2], 4
      %s23 = int_to_ptr.vmem [resolvable:$true] %s22
      %25 = dma.hbm_to_vmem [thread:$0]  %s0, 512, %s23, [#allocation3]
    $region5: #{tpu_custom_call.1} parent=1 // pred_fallthru
      _
    // Predicated region
    $region6: #{tpu_custom_call.1} parent=1 // pred_check
      _
    $region7: #{tpu_custom_call.1} parent=1 // pred_check_branch
      %27 = sbr.rel (0) target = $region9
    $region8: #{tpu_custom_call.1} parent=1 // pred_region
      %s29 = ssub.s32 128, 128
      %30 = vsyncadd [#allocation6], %s29
      %s32 = sshll.u32 [#allocation5], 4
      %s33 = int_to_ptr.vmem [resolvable:$true] %s32
      %35 = dma.hbm_to_vmem [thread:$0]  %s1, 128, %s33, [#allocation6]
    $region9: #{tpu_custom_call.1} parent=1 // pred_fallthru
      _
    // Predicated region
    $region10: #{tpu_custom_call.1} parent=1 // pred_check
      _
    $region11: #{tpu_custom_call.1} parent=1 // pred_check_branch
      %37 = sbr.rel (0) target = $region13
    $region12: #{tpu_custom_call.1} parent=1 // pred_region
      %s39 = ssub.s32 128, 128
      %40 = vsyncadd [#allocation6], %s39
      %s42 = sshll.u32 [#allocation7], 4
      %s43 = int_to_ptr.vmem [resolvable:$true] %s42
      %45 = dma.hbm_to_vmem [thread:$0]  %s2, 128, %s43, [#allocation6]
    $region13: #{tpu_custom_call.1} parent=1 // pred_fallthru
      _
    // Predicated region
    $region14: #{tpu_custom_call.1} parent=1 // pred_check
      _
    $region15: #{tpu_custom_call.1} parent=1 // pred_check_branch
      %47 = sbr.rel (0) target = $region17
    $region16: #{tpu_custom_call.1} parent=1 // pred_region
      %s49 = ssub.s32 512, 512
      %50 = vsyncadd [#allocation9], %s49
      %s52 = sshll.u32 [#allocation8], 4
      %s53 = int_to_ptr.vmem [resolvable:$true] %s52
      %55 = dma.hbm_to_vmem [thread:$0]  %s3, 512, %s53, [#allocation9]
    $region17: #{tpu_custom_call.1} parent=1 // pred_fallthru
      _
    // Predicated region
    $region18: #{tpu_custom_call.1} parent=1 // pred_check
      _
    $region19: #{tpu_custom_call.1} parent=1 // pred_check_branch
      %57 = sbr.rel (0) target = $region21
    $region20: #{tpu_custom_call.1} parent=1 // pred_region
      %58 = dma.done [#allocation3], 512
    $region21: #{tpu_custom_call.1} parent=1 // pred_fallthru
      _
    // Predicated region
    $region22: #{tpu_custom_call.1} parent=1 // pred_check
      _
    $region23: #{tpu_custom_call.1} parent=1 // pred_check_branch
      %60 = sbr.rel (0) target = $region25
    $region24: #{tpu_custom_call.1} parent=1 // pred_region
      %61 = dma.done [#allocation6], 128
    $region25: #{tpu_custom_call.1} parent=1 // pred_fallthru
      _
    // Predicated region
    $region26: #{tpu_custom_call.1} parent=1 // pred_check
      _
    $region27: #{tpu_custom_call.1} parent=1 // pred_check_branch
      %63 = sbr.rel (0) target = $region29
    $region28: #{tpu_custom_call.1} parent=1 // pred_region
      %64 = dma.done [#allocation6], 128
    $region29: #{tpu_custom_call.1} parent=1 // pred_fallthru
      _
    // Predicated region
    $region30: #{tpu_custom_call.1} parent=1 // pred_check
      _
    $region31: #{tpu_custom_call.1} parent=1 // pred_check_branch
      %66 = sbr.rel (0) target = $region33
    $region32: #{tpu_custom_call.1} parent=1 // pred_region
      %67 = dma.done [#allocation9], 512
    $region33: #{tpu_custom_call.1} parent=1 // pred_fallthru
      _
    %v70 = vld [vmem:[#allocation2] sm:$0x7f]
    %v71 = vld [vmem:[#allocation2 + $0x8] sm:$0x7f]
    %v72 = vld [vmem:[#allocation2 + $0x10] sm:$0x7f]
    %v73 = vld [vmem:[#allocation2 + $0x18] sm:$0x7f]
    %vm74 = vcmp.gt.f32.partialorder %v70, 0.05
    %vm75 = vcmp.gt.f32.partialorder %v71, 0.05
    %vm76 = vcmp.gt.f32.partialorder %v72, 0.05
    %vm77 = vcmp.gt.f32.partialorder %v73, 0.05
    %v78 = vld [vmem:[#allocation5] sm:$0xff]
    %vm79 = vnez %v78
    %v80 = vld [vmem:[#allocation7] sm:$0xff]
    %vm81 = vnez %v80
    %vm82 = vmand %vm79, %vm81
    %v83 = vsel %vm82, 16843009, 0
    %v84 = vunpack.c.0.s8 %v83
    %v85 = vunpack.c.1.s8 %v83
    %v86 = vunpack.c.2.s8 %v83
    %v87 = vunpack.c.3.s8 %v83
    %vm88 = vcmp.ne.s32.totalorder %v84, 0
    %vm89 = vcmp.ne.s32.totalorder %v85, 0
    %vm90 = vcmp.ne.s32.totalorder %v86, 0
    %vm91 = vcmp.ne.s32.totalorder %v87, 0
    %vm92 = vmand %vm74, %vm88
    %vm93 = vmand %vm75, %vm89
    %vm94 = vmand %vm76, %vm90
    %vm95 = vmand %vm77, %vm91
    %vm96 = vmpackc.low %vm92, %vm92
    %vm97 = vmpackc.even %vm96, %vm96
    %vm98 = vmpackc.low %vm93, %vm93
    %vm99 = vmpackc.even %vm98, %vm98
    %vm100 = vmpackc.low %vm94, %vm94
    %vm101 = vmpackc.even %vm100, %vm100
    %vm102 = vmpackc.low %vm95, %vm95
    %vm103 = vmpackc.even %vm102, %vm102
    %v104 = vsel %vm97, 16843009, 0
    %v105 = vsel %vm99, 16843009, 0
    %v106 = vsel %vm101, 16843009, 0
    %v107 = vsel %vm103, 16843009, 0
    %v108 = vunpack.c.0.s8 %v104
    %v109 = vunpack.c.0.s8 %v105
    %v110 = vunpack.c.0.s8 %v106
    %v111 = vunpack.c.0.s8 %v107
    %v112 = vpack.c.b16 %v109, %v108
    %v113 = vpack.c.b16 %v111, %v110
    %v114 = vpack.c.b8 %v113, %v112
    %vm115 = vcmask 1041408
    %vm116 = vsmask.f32 1536
    %vm117 = vmand %vm115, %vm116
    %vm118 = vcmask 1043458
    %vm119 = vsmask.f32 3584
    %vm120 = vmand %vm118, %vm119
    %vm121 = vmor %vm120, %vm117
    %vm122 = vcmask 1045508
    %vm123 = vsmask.f32 5632
    %vm124 = vmand %vm122, %vm123
    %vm125 = vmor %vm124, %vm121
    %vm126 = vcmask 1047558
    %vm127 = vsmask.f32 7680
    %vm128 = vmand %vm126, %vm127
    %vm129 = vmor %vm128, %vm125
    %v130 = vld [vmem:[#allocation11] sm:$0xff]
    %v131 = vsel %vm129, %v114, %v130
    %132 = vst [vmem:[#allocation11] sm:$0xff] %v131
    %v133 = vld [vmem:[#allocation8] sm:$0x7f]
    %v134 = vld [vmem:[#allocation8 + $0x8] sm:$0x7f]
    %v135 = vld [vmem:[#allocation8 + $0x10] sm:$0x7f]
    %v136 = vld [vmem:[#allocation8 + $0x18] sm:$0x7f]
    %vm137 = vcmp.ge.f32.partialorder %v133, 16.0
    %vm138 = vcmp.ge.f32.partialorder %v134, 16.0
    %vm139 = vcmp.ge.f32.partialorder %v135, 16.0
    %vm140 = vcmp.ge.f32.partialorder %v136, 16.0
    %vm141 = vmand %vm92, %vm137
    %vm142 = vmand %vm93, %vm138
    %vm143 = vmand %vm94, %vm139
    %vm144 = vmand %vm95, %vm140
    %v145 = vsel %vm141, 1, 0
    %v146 = vsel %vm142, 1, 0
    %v147 = vsel %vm143, 1, 0
    %v148 = vsel %vm144, 1, 0
    %v149 = vcvt.s32.f32 %v145
    %v150 = vcvt.s32.f32 %v146
    %v151 = vcvt.s32.f32 %v147
    %v152 = vcvt.s32.f32 %v148
    %vm153 = vcmask 1046528
    %v154 = vsel %vm153, %v149, 0.0
    %v155 = vsel %vm153, %v150, 0.0
    %v156 = vadd.f32 %v154, %v155
    %v157 = vsel %vm153, %v151, 0.0
    %v158 = vadd.f32 %v156, %v157
    %v159 = vsel %vm153, %v152, 0.0
    %v160 = vadd.f32 %v158, %v159
    %161 = vadd.xlane.f32.xlu0 %v160
    %v162 = vpop.xlane.xlu0 %161
    %163 = vst [vmem:[#allocation10] sm:$0x7f] %v162
    %vm164 = vcmp.ge.f32.partialorder %v133, 8.0
    %vm165 = vcmp.ge.f32.partialorder %v134, 8.0
    %vm166 = vcmp.ge.f32.partialorder %v135, 8.0
    %vm167 = vcmp.ge.f32.partialorder %v136, 8.0
    %vm168 = vmand %vm92, %vm164
    %vm169 = vmand %vm93, %vm165
    %vm170 = vmand %vm94, %vm166
    %vm171 = vmand %vm95, %vm167
    %v172 = vsel %vm168, 1, 0
    %v173 = vsel %vm169, 1, 0
    %v174 = vsel %vm170, 1, 0
    %v175 = vsel %vm171, 1, 0
    %v176 = vcvt.s32.f32 %v172
    %v177 = vcvt.s32.f32 %v173
    %v178 = vcvt.s32.f32 %v174
    %v179 = vcvt.s32.f32 %v175
    %v180 = vsel %vm153, %v176, 0.0
    %v181 = vsel %vm153, %v177, 0.0
    %v182 = vadd.f32 %v180, %v181
    %v183 = vsel %vm153, %v178, 0.0
    %v184 = vadd.f32 %v182, %v183
    %v185 = vsel %vm153, %v179, 0.0
    %v186 = vadd.f32 %v184, %v185
    %187 = vadd.xlane.f32.xlu0 %v186
    %v188 = vpop.xlane.xlu0 %187
    %s189 = scalar_lea.vmem [#allocation10], 8
    %190 = vst [vmem:[%s189] sm:$0x7f] %v188
    %vm191 = vcmp.ge.f32.partialorder %v133, 4.0
    %vm192 = vcmp.ge.f32.partialorder %v134, 4.0
    %vm193 = vcmp.ge.f32.partialorder %v135, 4.0
    %vm194 = vcmp.ge.f32.partialorder %v136, 4.0
    %vm195 = vmand %vm92, %vm191
    %vm196 = vmand %vm93, %vm192
    %vm197 = vmand %vm94, %vm193
    %vm198 = vmand %vm95, %vm194
    %v199 = vsel %vm195, 1, 0
    %v200 = vsel %vm196, 1, 0
    %v201 = vsel %vm197, 1, 0
    %v202 = vsel %vm198, 1, 0
    %v203 = vcvt.s32.f32 %v199
    %v204 = vcvt.s32.f32 %v200
    %v205 = vcvt.s32.f32 %v201
    %v206 = vcvt.s32.f32 %v202
    %v207 = vsel %vm153, %v203, 0.0
    %v208 = vsel %vm153, %v204, 0.0
    %v209 = vadd.f32 %v207, %v208
    %v210 = vsel %vm153, %v205, 0.0
    %v211 = vadd.f32 %v209, %v210
    %v212 = vsel %vm153, %v206, 0.0
    %v213 = vadd.f32 %v211, %v212
    %214 = vadd.xlane.f32.xlu0 %v213
    %v215 = vpop.xlane.xlu0 %214
    %s216 = scalar_lea.vmem [#allocation10], 16
    %217 = vst [vmem:[%s216] sm:$0x7f] %v215
    %vm218 = vcmp.ge.f32.partialorder %v133, 2.0
    %vm219 = vcmp.ge.f32.partialorder %v134, 2.0
    %vm220 = vcmp.ge.f32.partialorder %v135, 2.0
    %vm221 = vcmp.ge.f32.partialorder %v136, 2.0
    %vm222 = vmand %vm92, %vm218
    %vm223 = vmand %vm93, %vm219
    %vm224 = vmand %vm94, %vm220
    %vm225 = vmand %vm95, %vm221
    %v226 = vsel %vm222, 1, 0
    %v227 = vsel %vm223, 1, 0
    %v228 = vsel %vm224, 1, 0
    %v229 = vsel %vm225, 1, 0
    %v230 = vcvt.s32.f32 %v226
    %v231 = vcvt.s32.f32 %v227
    %v232 = vcvt.s32.f32 %v228
    %v233 = vcvt.s32.f32 %v229
    %v234 = vsel %vm153, %v230, 0.0
    %v235 = vsel %vm153, %v231, 0.0
    %v236 = vadd.f32 %v234, %v235
    %v237 = vsel %vm153, %v232, 0.0
    %v238 = vadd.f32 %v236, %v237
    %v239 = vsel %vm153, %v233, 0.0
    %v240 = vadd.f32 %v238, %v239
    %241 = vadd.xlane.f32.xlu0 %v240
    %v242 = vpop.xlane.xlu0 %241
    %s243 = scalar_lea.vmem [#allocation10], 24
    %244 = vst [vmem:[%s243] sm:$0x7f] %v242
    %vm245 = vcmp.ge.f32.partialorder %v133, 1.0
    %vm246 = vcmp.ge.f32.partialorder %v134, 1.0
    %vm247 = vcmp.ge.f32.partialorder %v135, 1.0
    %vm248 = vcmp.ge.f32.partialorder %v136, 1.0
    %vm249 = vmand %vm92, %vm245
    %vm250 = vmand %vm93, %vm246
    %vm251 = vmand %vm94, %vm247
    %vm252 = vmand %vm95, %vm248
    %v253 = vsel %vm249, 1, 0
    %v254 = vsel %vm250, 1, 0
    %v255 = vsel %vm251, 1, 0
    %v256 = vsel %vm252, 1, 0
    %v257 = vcvt.s32.f32 %v253
    %v258 = vcvt.s32.f32 %v254
    %v259 = vcvt.s32.f32 %v255
    %v260 = vcvt.s32.f32 %v256
    %v261 = vsel %vm153, %v257, 0.0
    %v262 = vsel %vm153, %v258, 0.0
    %v263 = vadd.f32 %v261, %v262
    %v264 = vsel %vm153, %v259, 0.0
    %v265 = vadd.f32 %v263, %v264
    %v266 = vsel %vm153, %v260, 0.0
    %v267 = vadd.f32 %v265, %v266
    %268 = vadd.xlane.f32.xlu0 %v267
    %v269 = vpop.xlane.xlu0 %268
    %s270 = scalar_lea.vmem [#allocation10], 32
    %271 = vst [vmem:[%s270] sm:$0x7f] %v269
    // Predicated region
    $region34: #{tpu_custom_call.1} parent=1 // pred_check
      _
    $region35: #{tpu_custom_call.1} parent=1 // pred_check_branch
      %273 = sbr.rel (0) target = $region37
    $region36: #{tpu_custom_call.1} parent=1 // pred_region
      %s275 = ssub.s32 640, 640
      %276 = vsyncadd [#allocation4], %s275
      %s277 = sshll.u32 [#allocation10], 4
      %s278 = int_to_ptr.vmem [resolvable:$true] %s277
      %283 = dma.vmem_to_hbm [thread:$0]  %s278, 640, %s4, [#allocation4], 128, 128, 8
    $region37: #{tpu_custom_call.1} parent=1 // pred_fallthru
      _
    // Predicated region
    $region38: #{tpu_custom_call.1} parent=1 // pred_check
      _
    $region39: #{tpu_custom_call.1} parent=1 // pred_check_branch
      %285 = sbr.rel (0) target = $region41
    $region40: #{tpu_custom_call.1} parent=1 // pred_region
      %s287 = ssub.s32 128, 128
      %288 = vsyncadd [#allocation12], %s287
      %s290 = sshll.u32 [#allocation11], 4
      %s291 = int_to_ptr.vmem [resolvable:$true] %s290
      %293 = dma.vmem_to_hbm [thread:$0]  %s291, 128, %s5, [#allocation12]
    $region41: #{tpu_custom_call.1} parent=1 // pred_fallthru
      _
    // Predicated region
    $region42: #{tpu_custom_call.1} parent=1 // pred_check
      _
    $region43: #{tpu_custom_call.1} parent=1 // pred_check_branch
      %295 = sbr.rel (0) target = $region45
    $region44: #{tpu_custom_call.1} parent=1 // pred_region
      %296 = dma.done [#allocation4], 640
    $region45: #{tpu_custom_call.1} parent=1 // pred_fallthru
      _
    // Predicated region
    $region46: #{tpu_custom_call.1} parent=1 // pred_check
      _
    $region47: #{tpu_custom_call.1} parent=1 // pred_check_branch
      %298 = sbr.rel (0) target = $region49
    $region48: #{tpu_custom_call.1} parent=1 // pred_region
      %299 = dma.done [#allocation12], 128
    $region49: #{tpu_custom_call.1} parent=1 // pred_fallthru
      _
    %300 = vsyncpa [#allocation3], 1
    %301 = vsyncpa [#allocation6], 1
    %302 = vsyncpa [#allocation9], 1
    %303 = vsyncpa [#allocation4], 1
    %304 = vsyncpa [#allocation12], 1

</llo_original>
